<compile_context>
chip_gen: v7x
topology: tpu7x:2x2x1
jax: 0.10.0
libtpu: 0.0.40
codegen_flags: <defaults>
</compile_context>

<pallas_src>
import functools

import jax
import jax.numpy as jnp
from jax import lax
from jax.experimental import pallas as pl
from jax.experimental.pallas import tpu as pltpu

KSIZE = 5
PAD = 2            # Conv1d padding
HALO = 8           # sublane-aligned time halo appended at the back (>= 2*PAD)
LANE = 128         # TPU lane width
BN_EPS = 1e-5


def _round_up(n, m):
    return ((n + m - 1) // m) * m


def _postnet_layer_kernel(len_ref, x_ref, w_ref, scale_ref, shift_ref, o_ref,
                          *, t_tile, apply_tanh):
    b = pl.program_id(0)
    ti = pl.program_id(1)
    length = len_ref[b]
    t0 = pl.multiple_of(ti * t_tile, 8)       # output tile start (orig. frames)
    slab_rows = t_tile + HALO
    cout = o_ref.shape[2]

    # Skip condition: the whole receptive field of this tile lies in the padded
    # region (t0 - PAD >= length), so conv(masked x) == 0 and the layer output
    # is the per-channel constant tanh?(BN shift).
    @pl.when(t0 < length + PAD)
    def _compute():
        # Aligned slab covering the receptive field of the tile's outputs.
        # Padded-time row j holds original frame (j - PAD); output frame t
        # reads slab-local rows (t - t0) + k, k = 0..4.
        slab = x_ref[0, pl.ds(t0, slab_rows), :]

        # impute(): zero out frames past input_lengths[b] (and the left halo).
        # TODO(synk): `impute` is defined outside the module; zero-masking of
        # padded frames (channels_last=False semantics) is assumed here.
        gids = t0 + lax.broadcasted_iota(jnp.int32, (slab_rows, 1), 0)
        valid = (gids >= PAD) & (gids < length + PAD)
        slab = jnp.where(valid, slab, jnp.zeros_like(slab))
        slab = slab.astype(jnp.bfloat16)      # bf16 MXU operands, f32 accum

        # Conv1d(k=5, stride=1, no bias): 5 aligned full-slab matmuls, tap
        # shifts applied to the f32 outputs (register sublane shifts — the
        # roll-style output combine, no unaligned VMEM reads).
        acc = jnp.zeros((t_tile, cout), jnp.float32)
        for k in range(KSIZE):
            y_k = jnp.dot(slab, w_ref[k], preferred_element_type=jnp.float32)
            acc = acc + lax.slice_in_dim(y_k, k, k + t_tile, axis=0)

        # BatchNorm1d (inference, folded) in f32; optional tanh; dropout is
        # identity in eval mode.
        y = acc * scale_ref[...] + shift_ref[...]
        if apply_tanh:
            y = jnp.tanh(y)
        o_ref[0] = y.astype(o_ref.dtype)

    @pl.when(t0 >= length + PAD)
    def _skip():
        y = jnp.broadcast_to(shift_ref[...], (t_tile, cout))
        if apply_tanh:
            y = jnp.tanh(y)
        o_ref[0] = y.astype(o_ref.dtype)


def postnet_layer(x, lengths, w, scale, shift, *, t_tile, apply_tanh, out_dtype):
    """x: (B, t_grid + HALO, Cin_pad) time-pre-padded; returns (B, t_grid, Cout_pad)."""
    B, t_in, cin = x.shape
    cout = w.shape[2]
    t_grid = t_in - HALO
    assert t_grid % t_tile == 0 and t_tile % 8 == 0
    nt = t_grid // t_tile

    kernel = functools.partial(_postnet_layer_kernel,
                               t_tile=t_tile, apply_tanh=apply_tanh)
    return pl.pallas_call(
        kernel,
        out_shape=jax.ShapeDtypeStruct((B, t_grid, cout), out_dtype),
        grid_spec=pltpu.PrefetchScalarGridSpec(
            num_scalar_prefetch=1,
            grid=(B, nt),
            in_specs=[
                # Full padded-time slab per batch element (block index constant
                # across ti -> DMA'd once per b, slab windows read via pl.ds).
                pl.BlockSpec((1, t_in, cin), lambda b, ti, lens: (b, 0, 0)),
                # Constant weight block (bf16).
                pl.BlockSpec((KSIZE, cin, cout), lambda b, ti, lens: (0, 0, 0)),
                pl.BlockSpec((1, cout), lambda b, ti, lens: (0, 0)),
                pl.BlockSpec((1, cout), lambda b, ti, lens: (0, 0)),
            ],
            out_specs=pl.BlockSpec((1, t_tile, cout),
                                   lambda b, ti, lens: (b, ti, 0)),
        ),
        compiler_params=pltpu.CompilerParams(
            dimension_semantics=("parallel", "parallel"),
            vmem_limit_bytes=48 * 1024 * 1024),
    )(lengths, x, w, scale, shift)


def init_postnet_params(key, num_mels, hidden, n_layers):
    """Deterministic synthetic parameters matching the PyTorch module shapes,
    zero-padded to lane-width channels, weights stored in bf16."""
    params = []
    for i in range(n_layers):
        cin = num_mels if i == 0 else hidden
        cout = num_mels if i == n_layers - 1 else hidden
        cin_p = _round_up(cin, LANE)
        cout_p = _round_up(cout, LANE)
        key, k1, k2, k3, k4, k5 = jax.random.split(key, 6)
        # PyTorch Conv1d weight is (out, in, k); we store it as (k, in, out).
        w = 0.1 * jax.random.normal(k1, (KSIZE, cin, cout), jnp.float32)
        gamma = 1.0 + 0.1 * jax.random.normal(k2, (cout,), jnp.float32)
        beta = 0.1 * jax.random.normal(k3, (cout,), jnp.float32)
        mean = 0.1 * jax.random.normal(k4, (cout,), jnp.float32)
        var = 1.0 + jnp.abs(jax.random.normal(k5, (cout,), jnp.float32))
        scale = gamma / jnp.sqrt(var + BN_EPS)
        shift = beta - mean * scale
        # Padded output channels get scale = shift = 0 so padded lanes stay 0.
        w_p = jnp.zeros((KSIZE, cin_p, cout_p), jnp.bfloat16)
        w_p = w_p.at[:, :cin, :cout].set(w.astype(jnp.bfloat16))
        scale_p = jnp.zeros((1, cout_p), jnp.float32).at[0, :cout].set(scale)
        shift_p = jnp.zeros((1, cout_p), jnp.float32).at[0, :cout].set(shift)
        params.append((w_p, scale_p, shift_p))
    return params


def postnet_forward(x, lengths, params, *, t_tile=256):
    B, T, num_mels = x.shape
    n = len(params)
    assert t_tile % 8 == 0
    t_tile = min(t_tile, _round_up(T, 8))
    t_grid = _round_up(T, t_tile)

    # Lane-pad channels once at the entry; stay channel-padded across layers.
    cin0 = params[0][0].shape[1]
    x = jnp.pad(x, ((0, 0), (0, 0), (0, cin0 - num_mels)))

    for i, (w, scale, shift) in enumerate(params):
        # Pre-pad time in the wrapper: PAD rows in front + aligned back halo,
        # total length t_grid + HALO (replaces the in-kernel xpad scratch).
        back = (t_grid + HALO) - PAD - x.shape[1]
        xp = jnp.pad(x, ((0, 0), (PAD, back), (0, 0)))
        out_dtype = jnp.float32 if i == n - 1 else jnp.bfloat16
        x = postnet_layer(xp, lengths, w, scale, shift,
                          t_tile=t_tile, apply_tanh=(i != n - 1),
                          out_dtype=out_dtype)
    return x[:, :T, :num_mels]


def postnet_reference(x, lengths, params):
    """Pure-JAX reference mirroring the PyTorch forward (eval mode) and the
    kernel's numerics (bf16 matmul operands, f32 accumulation, bf16 inter-layer
    activations)."""
    B, T, num_mels = x.shape
    n = len(params)
    cin0 = params[0][0].shape[1]
    xc = jnp.pad(x, ((0, 0), (0, 0), (0, cin0 - num_mels)))
    valid = (jnp.arange(T)[None, :, None] < lengths[:, None, None])
    for i, (w, scale, shift) in enumerate(params):
        xm = jnp.where(valid, xc, 0).astype(jnp.bfloat16)
        xp = jnp.pad(xm, ((0, 0), (PAD, PAD), (0, 0)))
        y = jnp.zeros((B, T, w.shape[2]), jnp.float32)
        for k in range(KSIZE):
            y = y + jnp.einsum("btc,cd->btd", xp[:, k:k + T, :], w[k],
                               preferred_element_type=jnp.float32)
        y = y * scale[None] + shift[None]
        if i != n - 1:
            y = jnp.tanh(y).astype(jnp.bfloat16)
        xc = y
    return xc[..., :num_mels].astype(jnp.float32)


if __name__ == "__main__":
    # Small hparams: num_mels=8, postnet_hidden=32, n_postnet_layer=3.
    # T=32 with t_tile=16 gives 2 time tiles so the padded-tile skip path is
    # exercised for the second batch element (length 10).
    B, T, NUM_MELS, HIDDEN, N_LAYERS = 2, 32, 8, 32, 3

    key = jax.random.PRNGKey(0)
    k_x, k_p = jax.random.split(key)
    inputs = jax.random.normal(k_x, (B, T, NUM_MELS), jnp.float32)
    input_lengths = jnp.array([T, 10], dtype=jnp.int32)
    params = init_postnet_params(k_p, NUM_MELS, HIDDEN, N_LAYERS)

    out = postnet_forward(inputs, input_lengths, params, t_tile=16)
    out = jax.block_until_ready(out)

    ref = postnet_reference(inputs, input_lengths, params)
    assert out.shape == (B, T, NUM_MELS)
    assert jnp.allclose(out, ref, atol=1e-2, rtol=1e-2), "mismatch vs reference"

    print("KERNEL_OK")
</pallas_src>

<mosaic_0001>
module attributes {stable_mosaic.version = 11 : i64} {
  func.func @_postnet_layer_kernel(%arg0: i32, %arg1: i32, %arg2: memref<2xi32, #tpu.memory_space<smem>>, %arg3: memref<1x40x128xf32, #tpu.memory_space<vmem>>, %arg4: memref<5x128x128xbf16, #tpu.memory_space<vmem>>, %arg5: memref<1x128xf32, #tpu.memory_space<vmem>>, %arg6: memref<1x128xf32, #tpu.memory_space<vmem>>, %arg7: memref<1x16x128xbf16, #tpu.memory_space<vmem>>) attributes {dimension_semantics = [#tpu.dimension_semantics<parallel>, #tpu.dimension_semantics<parallel>], iteration_bounds = array<i64: 2, 2>, scalar_prefetch = 1 : i64, scratch_operands = 0 : i64, tpu.core_type = #tpu.core_type<tc>, window_params = [{transform_indices = @transform_0, window_bounds = array<i64: 1, 40, 128>}, {pipeline_mode = #tpu.pipeline_mode<synchronous>, transform_indices = @transform_1, window_bounds = array<i64: 5, 128, 128>}, {pipeline_mode = #tpu.pipeline_mode<synchronous>, transform_indices = @transform_2, window_bounds = array<i64: 1, 128>}, {pipeline_mode = #tpu.pipeline_mode<synchronous>, transform_indices = @transform_3, window_bounds = array<i64: 1, 128>}, {transform_indices = @transform_4, window_bounds = array<i64: 1, 16, 128>}]} {
    %0 = arith.index_cast %arg0 : i32 to index
    %1 = memref.load %arg2[%0] : memref<2xi32, #tpu.memory_space<smem>>
    %c16_i32 = arith.constant 16 : i32
    %2 = arith.muli %arg1, %c16_i32 : i32
    %3 = tpu.assume_multiple %2, 8 : i32
    %c2_i32 = arith.constant 2 : i32
    %4 = arith.addi %1, %c2_i32 : i32
    %5 = arith.cmpi slt, %3, %4 : i32
    %6 = arith.extui %5 : i1 to i32
    %c0_i32 = arith.constant 0 : i32
    %7 = arith.cmpi ne, %6, %c0_i32 : i32
    scf.if %7 {
      %c0 = arith.constant 0 : index
      %12 = arith.index_cast %3 : i32 to index
      %c0_2 = arith.constant 0 : index
      %13 = vector.load %arg3[%c0, %12, %c0_2] : memref<1x40x128xf32, #tpu.memory_space<vmem>>, vector<1x24x128xf32>
      %14 = vector.shape_cast %13 : vector<1x24x128xf32> to vector<24x128xf32>
      %15 = tpu.iota {dimensions = array<i32: 0>} : vector<24x1xi32>
      %16 = vector.broadcast %3 : i32 to vector<24x1xi32>
      %17 = arith.addi %16, %15 : vector<24x1xi32>
      %c2_i32_3 = arith.constant 2 : i32
      %18 = vector.broadcast %c2_i32_3 : i32 to vector<24x1xi32>
      %19 = arith.cmpi sge, %17, %18 : vector<24x1xi32>
      %c2_i32_4 = arith.constant 2 : i32
      %20 = arith.addi %1, %c2_i32_4 : i32
      %21 = vector.broadcast %20 : i32 to vector<24x1xi32>
      %22 = arith.cmpi slt, %17, %21 : vector<24x1xi32>
      %23 = arith.andi %19, %22 : vector<24x1xi1>
      %cst = arith.constant 0.000000e+00 : f32
      %24 = vector.broadcast %cst : f32 to vector<24x128xf32>
      %25 = vector.shape_cast %23 : vector<24x1xi1> to vector<24x1xi1>
      %26 = vector.broadcast %25 : vector<24x1xi1> to vector<24x128xi1>
      %27 = arith.select %26, %14, %24 : vector<24x128xi1>, vector<24x128xf32>
      %28 = arith.truncf %27 : vector<24x128xf32> to vector<24x128xbf16>
      %cst_5 = arith.constant 0.000000e+00 : f32
      %29 = vector.broadcast %cst_5 : f32 to vector<16x128xf32>
      %c0_6 = arith.constant 0 : index
      %c0_7 = arith.constant 0 : index
      %c0_8 = arith.constant 0 : index
      %30 = vector.load %arg4[%c0_6, %c0_7, %c0_8] : memref<5x128x128xbf16, #tpu.memory_space<vmem>>, vector<1x128x128xbf16>
      %31 = vector.shape_cast %30 : vector<1x128x128xbf16> to vector<128x128xbf16>
      %cst_9 = arith.constant dense<0.000000e+00> : vector<24x128xf32>
      %32 = tpu.matmul %28, %31, %cst_9 {dimension_numbers = #tpu.dot_dimension_numbers<[1], [0], [0], [1], [0, 0, 1, 1], [], []>} : vector<24x128xbf16>, vector<128x128xbf16>, vector<24x128xf32> -> vector<24x128xf32>
      %33 = vector.extract_strided_slice %32 {offsets = [0, 0], sizes = [16, 128], strides = [1, 1]} : vector<24x128xf32> to vector<16x128xf32>
      %34 = arith.addf %29, %33 : vector<16x128xf32>
      %c1 = arith.constant 1 : index
      %c0_10 = arith.constant 0 : index
      %c0_11 = arith.constant 0 : index
      %35 = vector.load %arg4[%c1, %c0_10, %c0_11] : memref<5x128x128xbf16, #tpu.memory_space<vmem>>, vector<1x128x128xbf16>
      %36 = vector.shape_cast %35 : vector<1x128x128xbf16> to vector<128x128xbf16>
      %cst_12 = arith.constant dense<0.000000e+00> : vector<24x128xf32>
      %37 = tpu.matmul %28, %36, %cst_12 {dimension_numbers = #tpu.dot_dimension_numbers<[1], [0], [0], [1], [0, 0, 1, 1], [], []>} : vector<24x128xbf16>, vector<128x128xbf16>, vector<24x128xf32> -> vector<24x128xf32>
      %38 = vector.extract_strided_slice %37 {offsets = [1, 0], sizes = [16, 128], strides = [1, 1]} : vector<24x128xf32> to vector<16x128xf32>
      %39 = arith.addf %34, %38 : vector<16x128xf32>
      %c2 = arith.constant 2 : index
      %c0_13 = arith.constant 0 : index
      %c0_14 = arith.constant 0 : index
      %40 = vector.load %arg4[%c2, %c0_13, %c0_14] : memref<5x128x128xbf16, #tpu.memory_space<vmem>>, vector<1x128x128xbf16>
      %41 = vector.shape_cast %40 : vector<1x128x128xbf16> to vector<128x128xbf16>
      %cst_15 = arith.constant dense<0.000000e+00> : vector<24x128xf32>
      %42 = tpu.matmul %28, %41, %cst_15 {dimension_numbers = #tpu.dot_dimension_numbers<[1], [0], [0], [1], [0, 0, 1, 1], [], []>} : vector<24x128xbf16>, vector<128x128xbf16>, vector<24x128xf32> -> vector<24x128xf32>
      %43 = vector.extract_strided_slice %42 {offsets = [2, 0], sizes = [16, 128], strides = [1, 1]} : vector<24x128xf32> to vector<16x128xf32>
      %44 = arith.addf %39, %43 : vector<16x128xf32>
      %c3 = arith.constant 3 : index
      %c0_16 = arith.constant 0 : index
      %c0_17 = arith.constant 0 : index
      %45 = vector.load %arg4[%c3, %c0_16, %c0_17] : memref<5x128x128xbf16, #tpu.memory_space<vmem>>, vector<1x128x128xbf16>
      %46 = vector.shape_cast %45 : vector<1x128x128xbf16> to vector<128x128xbf16>
      %cst_18 = arith.constant dense<0.000000e+00> : vector<24x128xf32>
      %47 = tpu.matmul %28, %46, %cst_18 {dimension_numbers = #tpu.dot_dimension_numbers<[1], [0], [0], [1], [0, 0, 1, 1], [], []>} : vector<24x128xbf16>, vector<128x128xbf16>, vector<24x128xf32> -> vector<24x128xf32>
      %48 = vector.extract_strided_slice %47 {offsets = [3, 0], sizes = [16, 128], strides = [1, 1]} : vector<24x128xf32> to vector<16x128xf32>
      %49 = arith.addf %44, %48 : vector<16x128xf32>
      %c4 = arith.constant 4 : index
      %c0_19 = arith.constant 0 : index
      %c0_20 = arith.constant 0 : index
      %50 = vector.load %arg4[%c4, %c0_19, %c0_20] : memref<5x128x128xbf16, #tpu.memory_space<vmem>>, vector<1x128x128xbf16>
      %51 = vector.shape_cast %50 : vector<1x128x128xbf16> to vector<128x128xbf16>
      %cst_21 = arith.constant dense<0.000000e+00> : vector<24x128xf32>
      %52 = tpu.matmul %28, %51, %cst_21 {dimension_numbers = #tpu.dot_dimension_numbers<[1], [0], [0], [1], [0, 0, 1, 1], [], []>} : vector<24x128xbf16>, vector<128x128xbf16>, vector<24x128xf32> -> vector<24x128xf32>
      %53 = vector.extract_strided_slice %52 {offsets = [4, 0], sizes = [16, 128], strides = [1, 1]} : vector<24x128xf32> to vector<16x128xf32>
      %54 = arith.addf %49, %53 : vector<16x128xf32>
      %c0_22 = arith.constant 0 : index
      %c0_23 = arith.constant 0 : index
      %55 = vector.load %arg5[%c0_22, %c0_23] : memref<1x128xf32, #tpu.memory_space<vmem>>, vector<1x128xf32>
      %56 = vector.broadcast %55 : vector<1x128xf32> to vector<16x128xf32>
      %57 = arith.mulf %54, %56 : vector<16x128xf32>
      %c0_24 = arith.constant 0 : index
      %c0_25 = arith.constant 0 : index
      %58 = vector.load %arg6[%c0_24, %c0_25] : memref<1x128xf32, #tpu.memory_space<vmem>>, vector<1x128xf32>
      %59 = vector.broadcast %58 : vector<1x128xf32> to vector<16x128xf32>
      %60 = arith.addf %57, %59 : vector<16x128xf32>
      %61 = math.tanh %60 : vector<16x128xf32>
      %62 = arith.truncf %61 : vector<16x128xf32> to vector<16x128xbf16>
      %c0_26 = arith.constant 0 : index
      %c0_27 = arith.constant 0 : index
      %c0_28 = arith.constant 0 : index
      %63 = vector.load %arg7[%c0_26, %c0_27, %c0_28] : memref<1x16x128xbf16, #tpu.memory_space<vmem>>, vector<1x16x128xbf16>
      %64 = vector.shape_cast %63 : vector<1x16x128xbf16> to vector<16x128xbf16>
      %65 = vector.shape_cast %62 : vector<16x128xbf16> to vector<1x16x128xbf16>
      tpu.vector_store %arg7[%c0_26, %c0_27, %c0_28], %65 {strides = array<i32>} : memref<1x16x128xbf16, #tpu.memory_space<vmem>>, vector<1x16x128xbf16>,
    } else {
    }
    %c2_i32_0 = arith.constant 2 : i32
    %8 = arith.addi %1, %c2_i32_0 : i32
    %9 = arith.cmpi sge, %3, %8 : i32
    %10 = arith.extui %9 : i1 to i32
    %c0_i32_1 = arith.constant 0 : i32
    %11 = arith.cmpi ne, %10, %c0_i32_1 : i32
    scf.if %11 {
      %c0 = arith.constant 0 : index
      %c0_2 = arith.constant 0 : index
      %12 = vector.load %arg6[%c0, %c0_2] : memref<1x128xf32, #tpu.memory_space<vmem>>, vector<1x128xf32>
      %13 = vector.shape_cast %12 : vector<1x128xf32> to vector<1x128xf32>
      %14 = vector.broadcast %13 : vector<1x128xf32> to vector<16x128xf32>
      %15 = math.tanh %14 : vector<16x128xf32>
      %16 = arith.truncf %15 : vector<16x128xf32> to vector<16x128xbf16>
      %c0_3 = arith.constant 0 : index
      %c0_4 = arith.constant 0 : index
      %c0_5 = arith.constant 0 : index
      %17 = vector.load %arg7[%c0_3, %c0_4, %c0_5] : memref<1x16x128xbf16, #tpu.memory_space<vmem>>, vector<1x16x128xbf16>
      %18 = vector.shape_cast %17 : vector<1x16x128xbf16> to vector<16x128xbf16>
      %19 = vector.shape_cast %16 : vector<16x128xbf16> to vector<1x16x128xbf16>
      tpu.vector_store %arg7[%c0_3, %c0_4, %c0_5], %19 {strides = array<i32>} : memref<1x16x128xbf16, #tpu.memory_space<vmem>>, vector<1x16x128xbf16>,
    } else {
    }
    return
  }
  func.func @transform_0(%arg0: i32, %arg1: i32, %arg2: memref<2xi32, #tpu.memory_space<smem>>) -> (i32, i32, i32) {
    %c0_i32 = arith.constant 0 : i32
    %c0_i32_0 = arith.constant 0 : i32
    %c0_i32_1 = arith.constant 0 : i32
    return %arg0, %c0_i32, %c0_i32_0 : i32, i32, i32
  }
  func.func @transform_1(%arg0: i32, %arg1: i32, %arg2: memref<2xi32, #tpu.memory_space<smem>>) -> (i32, i32, i32) {
    %c0_i32 = arith.constant 0 : i32
    %c0_i32_0 = arith.constant 0 : i32
    %c0_i32_1 = arith.constant 0 : i32
    %c0_i32_2 = arith.constant 0 : i32
    return %c0_i32, %c0_i32_0, %c0_i32_1 : i32, i32, i32
  }
  func.func @transform_2(%arg0: i32, %arg1: i32, %arg2: memref<2xi32, #tpu.memory_space<smem>>) -> (i32, i32) {
    %c0_i32 = arith.constant 0 : i32
    %c0_i32_0 = arith.constant 0 : i32
    %c0_i32_1 = arith.constant 0 : i32
    return %c0_i32, %c0_i32_0 : i32, i32
  }
  func.func @transform_3(%arg0: i32, %arg1: i32, %arg2: memref<2xi32, #tpu.memory_space<smem>>) -> (i32, i32) {
    %c0_i32 = arith.constant 0 : i32
    %c0_i32_0 = arith.constant 0 : i32
    %c0_i32_1 = arith.constant 0 : i32
    return %c0_i32, %c0_i32_0 : i32, i32
  }
  func.func @transform_4(%arg0: i32, %arg1: i32, %arg2: memref<2xi32, #tpu.memory_space<smem>>) -> (i32, i32, i32) {
    %c0_i32 = arith.constant 0 : i32
    %c0_i32_0 = arith.constant 0 : i32
    return %arg0, %arg1, %c0_i32 : i32, i32, i32
  }
}

</mosaic_0001>

<llo_original>
// kernel: tpu_custom_call.1
$region0: #{tpu_custom_call.1}
  #allocation0 [shape = 'u32[]', space=smem, size = 0x4, offset = 0x4, fixed_abs, tag = 'smem constant byte address 0x4 - core index']
  #allocation1 [shape = 'u32[144,128]{1,0:T(1,128)}', space=vmem, size = 0x12000, scoped, tag = 'internal scratch']
  #allocation2 [shape = 's32[1]{0}', space=sflag, size = 0x4, scoped, tag = 'scoped memory for tpu_custom_call.1']
  #allocation3 [shape = 'u8[512]{0}', space=smem, size = 0x200, scoped, tag = 'prefetched SMEM operand 0']
  %s0 = inlined_call_operand.hbm [shape: s32[2], index: 0, kind: input, shape index: {}]
  %s1 = inlined_call_operand.hbm [shape: f32[2,40,128], index: 1, kind: input, shape index: {}]
  %s2 = inlined_call_operand.hbm [shape: bf16[5,128,128], index: 2, kind: input, shape index: {}]
  %s3 = inlined_call_operand.vmem [shape: f32[1,128], index: 3, kind: input, shape index: {}]
  %s4 = inlined_call_operand.vmem [shape: f32[1,128], index: 4, kind: input, shape index: {}]
  %s5 = inlined_call_operand.hbm [shape: bf16[2,32,128], index: 5, kind: output, shape index: {}]
  %s6 = sld [smem:[#allocation0]]
  $region65: #{tpu_custom_call.1} parent=0
    _
  %s8 = ssub.s32 1, %s6
  %s9 = scalar_select 0, %s8, %s6
  %11 = dma.hbm_to_smem %s0, 16, [#allocation3], [#allocation2]
  %12 = dma.done [#allocation2], 16
  %13 = sfence
  $region1: #{tpu_custom_call.1} parent=0
    #allocation4 [shape = 'u8[40960]{0}', space=vmem, size = 0xa000, scoped, tag = 'input window, operand 1']
    #allocation5 [shape = 's32[2]{0}', space=sflag, size = 0x8, scoped, tag = 'scoped memory for tpu_custom_call.1']
    #allocation6 [shape = 's32[2]{0}', space=sflag, size = 0x8, scoped, tag = 'scoped memory for tpu_custom_call.1']
    #allocation7 [shape = 'u8[163840]{0}', space=vmem, size = 0x28000, scoped, tag = 'input window, operand 2, single buffered']
    #allocation8 [shape = 's32[1]{0}', space=sflag, size = 0x4, scoped, tag = 'scoped memory for tpu_custom_call.1']
    #allocation9 [shape = 'u8[8192]{0}', space=vmem, size = 0x2000, scoped, tag = 'output window, operand 0']
    %14 = vsyncpa [#allocation5], 0
    %s15 = scalar_lea.sflag [#allocation5], 1
    %16 = vsyncpa %s15, 0
    %17 = vsyncpa [#allocation8], 0
    %18 = vsyncpa [#allocation6], 0
    %s19 = scalar_lea.sflag [#allocation6], 1
    %20 = vsyncpa %s19, 0
    loop: start=0, step=1, limit=6
    $region2: #{tpu_custom_call.1} parent=1 // loop_pre_header
      _
    $region3: #{tpu_custom_call.1} parent=1 // loop_header
      %s22 = sphi 0, %s26
      %p23 = scmp.ge.s32.totalorder %s22, 6
      %s29 = sphi 0, %s41
      %s30 = sphi 0, %s37
      %s31 = sphi 0, %s29
      %s32 = sphi 0, %s30
      %s33 = sphi 0, %s31
      %s34 = sphi 0, %s32
      %s44 = sphi 0, %s46
      %s47 = sphi 0, %s44
      %s48 = sphi 0, %s47
      %s64 = sphi 0, %s48
      %s68 = sphi 0, %s68
      %s70 = sphi 0, %s68
      %s71 = sphi 0, %s70
      %s85 = sphi 0, %s71
      %s89 = sphi 0, %s89
      %s91 = sphi 0, %s89
      %s92 = sphi 0, %s91
      %s106 = sphi 0, %s92
      %s110 = sphi 0, %s110
      %s112 = sphi 0, %s110
      %s113 = sphi 0, %s112
      %s127 = sphi 0, %s113
      %s135 = sphi 0, %s137
      %s138 = sphi 0, %s135
      %s139 = sphi 0, %s138
      %s155 = sphi 0, %s139
    $region4: #{tpu_custom_call.1} parent=1 // loop_header_branch
      %25 = sbr.rel (%p23) target = $region8
    $region5: #{tpu_custom_call.1} parent=1 // loop_body
      %s27 = ssub.s32 %s22, 1
      %s28 = ssub.s32 %s22, 2
      %s35 = sadd.s32 1, %s30
      %p36 = scmp.ge.s32.totalorder %s35, 2
      %s37 = scalar_select %p36, 0, %s35
      %s38 = sadd.s32 1, %s29
      %s39 = scalar_select %p36, %s38, %s29
      %p40 = scmp.ge.s32.totalorder %s39, 2
      %s41 = scalar_select %p40, 0, %s39
      %s42 = ssub.s32 %s29, %s41
      %p43 = scmp.eq.s32.totalorder %s42, 0
      %s45 = sadd.s32 %s44, 1
      %s46 = scalar_select %p43, %s44, %s45
      %p49 = pneg %p43
      %p50 = scmp.eq.s32.totalorder %s22, 3
      %p51 = por %p49, %p50
      %p52 = scmp.ne.s32.totalorder %s44, %s47
      %p53 = scmp.eq.s32.totalorder %s22, 0
      %p54 = por %p52, %p53
      %p55 = scmp.ne.s32.totalorder %s44, %s47
      %p56 = scmp.eq.s32.totalorder %s27, 3
      %p57 = por %p55, %p56
      %p58 = scmp.ne.s32.totalorder %s47, %s48
      %p59 = scmp.eq.s32.totalorder %s27, 0
      %p60 = por %p58, %p59
      %p61 = scmp.ne.s32.totalorder %s47, %s48
      %p62 = scmp.eq.s32.totalorder %s28, 3
      %p63 = por %p61, %p62
      %p65 = scmp.ne.s32.totalorder %s48, %s64
      %p66 = scmp.eq.s32.totalorder %s28, 0
      %p67 = por %p65, %p66
      %s69 = sadd.s32 %s68, 1
      %p72 = scmp.eq.s32.totalorder %s22, 3
      %p73 = scmp.ne.s32.totalorder %s68, %s70
      %p74 = scmp.eq.s32.totalorder %s22, 0
      %p75 = por %p73, %p74
      %p76 = scmp.ne.s32.totalorder %s68, %s70
      %p77 = scmp.eq.s32.totalorder %s27, 3
      %p78 = por %p76, %p77
      %p79 = scmp.ne.s32.totalorder %s70, %s71
      %p80 = scmp.eq.s32.totalorder %s27, 0
      %p81 = por %p79, %p80
      %p82 = scmp.ne.s32.totalorder %s70, %s71
      %p83 = scmp.eq.s32.totalorder %s28, 3
      %p84 = por %p82, %p83
      %p86 = scmp.ne.s32.totalorder %s71, %s85
      %p87 = scmp.eq.s32.totalorder %s28, 0
      %p88 = por %p86, %p87
      %s90 = sadd.s32 %s89, 1
      %p93 = scmp.eq.s32.totalorder %s22, 3
      %p94 = scmp.ne.s32.totalorder %s89, %s91
      %p95 = scmp.eq.s32.totalorder %s22, 0
      %p96 = por %p94, %p95
      %p97 = scmp.ne.s32.totalorder %s89, %s91
      %p98 = scmp.eq.s32.totalorder %s27, 3
      %p99 = por %p97, %p98
      %p100 = scmp.ne.s32.totalorder %s91, %s92
      %p101 = scmp.eq.s32.totalorder %s27, 0
      %p102 = por %p100, %p101
      %p103 = scmp.ne.s32.totalorder %s91, %s92
      %p104 = scmp.eq.s32.totalorder %s28, 3
      %p105 = por %p103, %p104
      %p107 = scmp.ne.s32.totalorder %s92, %s106
      %p108 = scmp.eq.s32.totalorder %s28, 0
      %p109 = por %p107, %p108
      %s111 = sadd.s32 %s110, 1
      %p114 = scmp.eq.s32.totalorder %s22, 3
      %p115 = scmp.ne.s32.totalorder %s110, %s112
      %p116 = scmp.eq.s32.totalorder %s22, 0
      %p117 = por %p115, %p116
      %p118 = scmp.ne.s32.totalorder %s110, %s112
      %p119 = scmp.eq.s32.totalorder %s27, 3
      %p120 = por %p118, %p119
      %p121 = scmp.ne.s32.totalorder %s112, %s113
      %p122 = scmp.eq.s32.totalorder %s27, 0
      %p123 = por %p121, %p122
      %p124 = scmp.ne.s32.totalorder %s112, %s113
      %p125 = scmp.eq.s32.totalorder %s28, 3
      %p126 = por %p124, %p125
      %p128 = scmp.ne.s32.totalorder %s113, %s127
      %p129 = scmp.eq.s32.totalorder %s28, 0
      %p130 = por %p128, %p129
      %s131 = ssub.s32 %s29, %s41
      %s132 = ssub.s32 %s30, %s37
      %s133 = sor.u32 %s131, %s132
      %p134 = scmp.eq.s32.totalorder %s133, 0
      %s136 = sadd.s32 %s135, 1
      %s137 = scalar_select %p134, %s135, %s136
      %p140 = pneg %p134
      %p141 = scmp.eq.s32.totalorder %s22, 3
      %p142 = por %p140, %p141
      %p143 = scmp.ne.s32.totalorder %s135, %s138
      %p144 = scmp.eq.s32.totalorder %s22, 0
      %p145 = por %p143, %p144
      %p146 = scmp.ne.s32.totalorder %s135, %s138
      %p147 = scmp.eq.s32.totalorder %s27, 3
      %p148 = por %p146, %p147
      %p149 = scmp.ne.s32.totalorder %s138, %s139
      %p150 = scmp.eq.s32.totalorder %s27, 0
      %p151 = por %p149, %p150
      %p152 = scmp.ne.s32.totalorder %s138, %s139
      %p153 = scmp.eq.s32.totalorder %s28, 3
      %p154 = por %p152, %p153
      %p156 = scmp.ne.s32.totalorder %s139, %s155
      %p157 = scmp.eq.s32.totalorder %s28, 0
      %p158 = por %p156, %p157
      %p159 = scmp.le.s32.totalorder 1, %s22
      %p160 = scmp.lt.s32.totalorder %s22, 5
      %p161 = pnand %p159, %p160
      %p162 = pneg %p161
      // Predicated region
      $region9: #{tpu_custom_call.1} parent=5 // pred_check
        _
      $region10: #{tpu_custom_call.1} parent=5 // pred_check_branch
        %164 = sbr.rel (%p161) target = $region12
      $region11: #{tpu_custom_call.1} parent=5 // pred_region
        %s165 = ssub.s32 %s22, 1
        // Predicated region
        $region13: #{tpu_custom_call.1} parent=11 // pred_check
          %p166 = pneg %p81
        $region14: #{tpu_custom_call.1} parent=11 // pred_check_branch
          %168 = sbr.rel (%p166) target = $region16
        $region15: #{tpu_custom_call.1} parent=11 // pred_region
          %s170 = ssub.s32 5120, 5120
          %171 = vsyncadd [#allocation8], %s170
          %s172 = sshll.u32 [#allocation7], 4
          %s173 = int_to_ptr.vmem [resolvable:$true] %s172
          %178 = dma.hbm_to_vmem [thread:$0]  %s2, 5120, %s173, [#allocation8], 64, 64, 4
        $region16: #{tpu_custom_call.1} parent=11 // pred_fallthru
          _
        // Predicated region
        $region17: #{tpu_custom_call.1} parent=11 // pred_check
          %p179 = pneg %p102
        $region18: #{tpu_custom_call.1} parent=11 // pred_check_branch
          %181 = sbr.rel (%p179) target = $region20
        $region19: #{tpu_custom_call.1} parent=11 // pred_region
          _
        $region20: #{tpu_custom_call.1} parent=11 // pred_fallthru
          _
        // Predicated region
        $region21: #{tpu_custom_call.1} parent=11 // pred_check
          %p182 = pneg %p123
        $region22: #{tpu_custom_call.1} parent=11 // pred_check_branch
          %184 = sbr.rel (%p182) target = $region24
        $region23: #{tpu_custom_call.1} parent=11 // pred_region
          _
        $region24: #{tpu_custom_call.1} parent=11 // pred_fallthru
          _
      $region12: #{tpu_custom_call.1} parent=5 // pred_fallthru
        _
      %p185 = scmp.lt.s32.totalorder %s22, 4
      // Predicated region
      $region25: #{tpu_custom_call.1} parent=5 // pred_check
        %p186 = pneg %p185
      $region26: #{tpu_custom_call.1} parent=5 // pred_check_branch
        %188 = sbr.rel (%p186) target = $region28
      $region27: #{tpu_custom_call.1} parent=5 // pred_region
        // Predicated region
        $region29: #{tpu_custom_call.1} parent=27 // pred_check
          %p189 = pneg %p54
        $region30: #{tpu_custom_call.1} parent=27 // pred_check_branch
          %191 = sbr.rel (%p189) target = $region32
        $region31: #{tpu_custom_call.1} parent=27 // pred_region
          %s192 = sand.u32 %s44, 1
          %s193 = scalar_lea.sflag [#allocation5], %s192
          %s194 = sand.u32 %s44, 1
          %s195 = smul.addr %s194, 40
          %s196 = scalar_lea.vmem [#allocation4], %s195
          %s198 = ssub.s32 640, 640
          %199 = vsyncadd %s193, %s198
          %s200 = smul.addr %s29, 5
          %s201 = smul.addr %s200, 128
          %s202 = scalar_lea.hbm %s1, %s201
          %s203 = sshll.u32 %s196, 4
          %s204 = int_to_ptr.vmem [resolvable:$true] %s203
          %209 = dma.hbm_to_vmem [thread:$0]  %s202, 640, %s204, %s193, 128, 128, 8
        $region32: #{tpu_custom_call.1} parent=27 // pred_fallthru
          _
      $region28: #{tpu_custom_call.1} parent=5 // pred_fallthru
        _
      %p210 = scmp.le.s32.totalorder 1, %s22
      %p211 = scmp.lt.s32.totalorder %s22, 5
      %p212 = pnand %p210, %p211
      %p213 = pneg %p212
      // Predicated region
      $region33: #{tpu_custom_call.1} parent=5 // pred_check
        _
      $region34: #{tpu_custom_call.1} parent=5 // pred_check_branch
        %215 = sbr.rel (%p212) target = $region36
      $region35: #{tpu_custom_call.1} parent=5 // pred_region
        %s216 = ssub.s32 %s22, 1
        %s217 = sand.u32 %s47, 1
        %s218 = scalar_lea.sflag [#allocation5], %s217
        %s219 = sand.u32 %s47, 1
        %s220 = smul.addr %s219, 40
        %s221 = scalar_lea.vmem [#allocation4], %s220
        // Predicated region
        $region37: #{tpu_custom_call.1} parent=35 // pred_check
          %p222 = pneg %p60
        $region38: #{tpu_custom_call.1} parent=35 // pred_check_branch
          %224 = sbr.rel (%p222) target = $region40
        $region39: #{tpu_custom_call.1} parent=35 // pred_region
          %225 = dma.done %s218, 640
        $region40: #{tpu_custom_call.1} parent=35 // pred_fallthru
          _
        // Predicated region
        $region41: #{tpu_custom_call.1} parent=35 // pred_check
          %p226 = pneg %p81
        $region42: #{tpu_custom_call.1} parent=35 // pred_check_branch
          %228 = sbr.rel (%p226) target = $region44
        $region43: #{tpu_custom_call.1} parent=35 // pred_region
          %229 = dma.done [#allocation8], 5120
        $region44: #{tpu_custom_call.1} parent=35 // pred_fallthru
          _
        %s230 = sand.u32 %s47, 1
        %s231 = scalar_lea.sflag [#allocation5], %s230
        %s232 = sand.u32 %s47, 1
        %s233 = smul.addr %s232, 40
        %s234 = scalar_lea.vmem [#allocation4], %s233
        %p235 = pneg %p60
        %p236 = pneg %p57
        %p237 = pneg %p81
        %p238 = pneg %p78
        %p239 = pneg %p102
        %p240 = pneg %p99
        %p241 = pneg %p123
        %p242 = pneg %p120
        %p243 = pneg %p151
        %p244 = pneg %p148
        %s245 = sand.u32 %s138, 1
        %s246 = scalar_lea.sflag [#allocation6], %s245
        %s247 = sand.u32 %s138, 1
        %s248 = smul.addr %s247, 8
        %s249 = scalar_lea.vmem [#allocation9], %s248
        %s250 = smul.u32 2, %s32
        %s252 = sld [smem:[#allocation3 + %s31]]
        %s253 = smul.u32 %s32, 16
        %s254 = sadd.s32 %s252, 2
        %p255 = scmp.lt.s32.totalorder %s253, %s254
        // Predicated region
        $region45: #{tpu_custom_call.1} parent=35 // pred_check
          %p256 = pneg %p255
        $region46: #{tpu_custom_call.1} parent=35 // pred_check_branch
          %258 = sbr.rel (%p256) target = $region48
        $region47: #{tpu_custom_call.1} parent=35 // pred_region
          %s259 = scalar_lea.vmem %s221, %s253 [#allocation4]
          %v260 = vld [vmem:[%s259] sm:$0xff]
          %v261 = vld [vmem:[%s259 + $0x8] sm:$0xff]
          %v262 = vld [vmem:[%s259 + $0x10] sm:$0xff]
          %v263 = vlaneseq
          %v264 = vshrl.u32 %v263, 7
          %v265 = vadd.s32 %v264, 8
          %v266 = vadd.s32 %v264, 16
          %v267 = vstv %s253
          %v268 = vadd.s32 %v267, %v264
          %v269 = vadd.s32 %v267, %v265
          %v270 = vadd.s32 %v267, %v266
          %vm271 = vcmp.ge.s32.totalorder %v268, 2
          %vm272 = vcmp.ge.s32.totalorder %v269, 2
          %vm273 = vcmp.ge.s32.totalorder %v270, 2
          %v274 = vstv %s254
          %vm275 = vcmp.lt.s32.totalorder %v268, %v274
          %vm276 = vcmp.lt.s32.totalorder %v269, %v274
          %vm277 = vcmp.lt.s32.totalorder %v270, %v274
          %vm278 = vmand %vm271, %vm275
          %vm279 = vmand %vm272, %vm276
          %vm280 = vmand %vm273, %vm277
          %v281 = vsel %vm278, 1, 0
          %v282 = vsel %vm279, 1, 0
          %v283 = vsel %vm280, 1, 0
          %vm284 = vcmp.eq.s32.totalorder %v281, 1
          %vm285 = vcmp.eq.s32.totalorder %v282, 1
          %vm286 = vcmp.eq.s32.totalorder %v283, 1
          %v287 = vsel %vm284, %v260, 0.0
          %v288 = vsel %vm285, %v261, 0.0
          %v289 = vsel %vm286, %v262, 0.0
          %v290 = vpack.c.bf16 %v288, %v287
          %v291 = vpack.c.bf16 %v289, %v289
          %v292 = vld [vmem:[#allocation7] sm:$0xf]
          %v293 = vld [vmem:[#allocation7 + $0x4] sm:$0xf]
          %v294 = vld [vmem:[#allocation7 + $0x8] sm:$0xf]
          %v295 = vld [vmem:[#allocation7 + $0xc] sm:$0xf]
          %v296 = vld [vmem:[#allocation7 + $0x10] sm:$0xf]
          %v297 = vld [vmem:[#allocation7 + $0x14] sm:$0xf]
          %v298 = vld [vmem:[#allocation7 + $0x18] sm:$0xf]
          %v299 = vld [vmem:[#allocation7 + $0x1c] sm:$0xf]
          %v300 = vld [vmem:[#allocation7 + $0x20] sm:$0xf]
          %v301 = vld [vmem:[#allocation7 + $0x24] sm:$0xf]
          %v302 = vld [vmem:[#allocation7 + $0x28] sm:$0xf]
          %v303 = vld [vmem:[#allocation7 + $0x2c] sm:$0xf]
          %v304 = vld [vmem:[#allocation7 + $0x30] sm:$0xf]
          %v305 = vld [vmem:[#allocation7 + $0x34] sm:$0xf]
          %v306 = vld [vmem:[#allocation7 + $0x38] sm:$0xf]
          %v307 = vld [vmem:[#allocation7 + $0x3c] sm:$0xf]
          %v324 = vunpack.c.l.b16 %v292
          %v325 = vunpack.c.l.b16 %v293
          %v326 = vunpack.c.l.b16 %v294
          %v327 = vunpack.c.l.b16 %v295
          %v328 = vunpack.c.l.b16 %v296
          %v329 = vunpack.c.l.b16 %v297
          %v330 = vunpack.c.l.b16 %v298
          %v331 = vunpack.c.l.b16 %v299
          %v332 = vunpack.c.l.b16 %v300
          %v333 = vunpack.c.l.b16 %v301
          %v334 = vunpack.c.l.b16 %v302
          %v335 = vunpack.c.l.b16 %v303
          %v336 = vunpack.c.l.b16 %v304
          %v337 = vunpack.c.l.b16 %v305
          %v338 = vunpack.c.l.b16 %v306
          %v339 = vunpack.c.l.b16 %v307
          %v340 = vpack.c.b16 %v325, %v324
          %v341 = vpack.c.b16 %v327, %v326
          %v342 = vpack.c.b16 %v329, %v328
          %v343 = vpack.c.b16 %v331, %v330
          %v344 = vpack.c.b16 %v333, %v332
          %v345 = vpack.c.b16 %v335, %v334
          %v346 = vpack.c.b16 %v337, %v336
          %v347 = vpack.c.b16 %v339, %v338
          %356 = vmatprep.subr.bf16.mxu0 0
          %357 = vmatpush1.bf16.msra.mxu0 %v340
          %358 = vmatprep.subr.bf16.mxu0 0
          %359 = vmatpush1.bf16.msra.mxu0 %v341
          %360 = vmatprep.subr.bf16.mxu0 0
          %361 = vmatpush1.bf16.msra.mxu0 %v342
          %362 = vmatprep.subr.bf16.mxu0 0
          %363 = vmatpush1.bf16.msra.mxu0 %v343
          %364 = vmatprep.subr.bf16.mxu0 0
          %365 = vmatpush1.bf16.msra.mxu0 %v344
          %366 = vmatprep.subr.bf16.mxu0 0
          %367 = vmatpush1.bf16.msra.mxu0 %v345
          %368 = vmatprep.subr.bf16.mxu0 0
          %369 = vmatpush1.bf16.msra.mxu0 %v346
          %370 = vmatprep.subr.bf16.mxu0 0
          %371 = vmatpush1.bf16.msra.mxu0 %v347
          %372 = vmatprep.subr.bf16.mxu0 0
          %373 = vmatpush1.bf16.msra.mxu0 0
          %374 = vmatprep.subr.bf16.mxu0 0
          %375 = vmatpush1.bf16.msra.mxu0 0
          %376 = vmatprep.subr.bf16.mxu0 0
          %377 = vmatpush1.bf16.msra.mxu0 0
          %378 = vmatprep.subr.bf16.mxu0 0
          %379 = vmatpush1.bf16.msra.mxu0 0
          %380 = vmatprep.subr.bf16.mxu0 0
          %381 = vmatpush1.bf16.msra.mxu0 0
          %382 = vmatprep.subr.bf16.mxu0 0
          %383 = vmatpush1.bf16.msra.mxu0 0
          %384 = vmatprep.subr.bf16.mxu0 0
          %385 = vmatpush1.bf16.msra.mxu0 0
          %386 = vmatprep.subr.bf16.mxu0 0
          %387 = vmatpush1.bf16.msra.mxu0 0
          %388 = vmatprep.mubr.bf16.mxu0 0
          %389 = vmatmul.mubr.bf16.gmra.mrb[0].mxu0 %v290
          %v390 = vpop.f32.mrb[0].mxu0
          %v391 = vadd.f32 0.0, %v390
          %v392 = vpop.f32.mrb[0].mxu0
          %v393 = vpop.f32.mrb[0].mxu0
          %v394 = vadd.f32 0.0, %v393
          %v395 = vpop.f32.mrb[0].mxu0
          %396 = vmatprep.mubr.bf16.mxu0 0
          %397 = vmatmul.mubr.bf16.gmra.mrb[0].mxu0 %v291
          %v398 = vpop.f32.mrb[0].mxu0
          %v399 = vpop.f32.mrb[0].mxu0
          %v400 = vpop.f32.mrb[0].mxu0
          %v401 = vpop.f32.mrb[0].mxu0
          %402 = vdwg.mxu0
          %v403 = vadd.f32 %v391, 0.0
          %v404 = vadd.f32 %v394, 0.0
          %s405 = scalar_lea.vmem [#allocation7], 64
          %v406 = vld [vmem:[%s405] sm:$0xf]
          %v407 = vld [vmem:[%s405 + $0x4] sm:$0xf]
          %v408 = vld [vmem:[%s405 + $0x8] sm:$0xf]
          %v409 = vld [vmem:[%s405 + $0xc] sm:$0xf]
          %v410 = vld [vmem:[%s405 + $0x10] sm:$0xf]
          %v411 = vld [vmem:[%s405 + $0x14] sm:$0xf]
          %v412 = vld [vmem:[%s405 + $0x18] sm:$0xf]
          %v413 = vld [vmem:[%s405 + $0x1c] sm:$0xf]
          %v414 = vld [vmem:[%s405 + $0x20] sm:$0xf]
          %v415 = vld [vmem:[%s405 + $0x24] sm:$0xf]
          %v416 = vld [vmem:[%s405 + $0x28] sm:$0xf]
          %v417 = vld [vmem:[%s405 + $0x2c] sm:$0xf]
          %v418 = vld [vmem:[%s405 + $0x30] sm:$0xf]
          %v419 = vld [vmem:[%s405 + $0x34] sm:$0xf]
          %v420 = vld [vmem:[%s405 + $0x38] sm:$0xf]
          %v421 = vld [vmem:[%s405 + $0x3c] sm:$0xf]
          %v438 = vunpack.c.l.b16 %v406
          %v439 = vunpack.c.l.b16 %v407
          %v440 = vunpack.c.l.b16 %v408
          %v441 = vunpack.c.l.b16 %v409
          %v442 = vunpack.c.l.b16 %v410
          %v443 = vunpack.c.l.b16 %v411
          %v444 = vunpack.c.l.b16 %v412
          %v445 = vunpack.c.l.b16 %v413
          %v446 = vunpack.c.l.b16 %v414
          %v447 = vunpack.c.l.b16 %v415
          %v448 = vunpack.c.l.b16 %v416
          %v449 = vunpack.c.l.b16 %v417
          %v450 = vunpack.c.l.b16 %v418
          %v451 = vunpack.c.l.b16 %v419
          %v452 = vunpack.c.l.b16 %v420
          %v453 = vunpack.c.l.b16 %v421
          %v454 = vpack.c.b16 %v439, %v438
          %v455 = vpack.c.b16 %v441, %v440
          %v456 = vpack.c.b16 %v443, %v442
          %v457 = vpack.c.b16 %v445, %v444
          %v458 = vpack.c.b16 %v447, %v446
          %v459 = vpack.c.b16 %v449, %v448
          %v460 = vpack.c.b16 %v451, %v450
          %v461 = vpack.c.b16 %v453, %v452
          %470 = vmatprep.subr.bf16.mxu0 0
          %471 = vmatpush1.bf16.msra.mxu0 %v454
          %472 = vmatprep.subr.bf16.mxu0 0
          %473 = vmatpush1.bf16.msra.mxu0 %v455
          %474 = vmatprep.subr.bf16.mxu0 0
          %475 = vmatpush1.bf16.msra.mxu0 %v456
          %476 = vmatprep.subr.bf16.mxu0 0
          %477 = vmatpush1.bf16.msra.mxu0 %v457
          %478 = vmatprep.subr.bf16.mxu0 0
          %479 = vmatpush1.bf16.msra.mxu0 %v458
          %480 = vmatprep.subr.bf16.mxu0 0
          %481 = vmatpush1.bf16.msra.mxu0 %v459
          %482 = vmatprep.subr.bf16.mxu0 0
          %483 = vmatpush1.bf16.msra.mxu0 %v460
          %484 = vmatprep.subr.bf16.mxu0 0
          %485 = vmatpush1.bf16.msra.mxu0 %v461
          %486 = vmatprep.subr.bf16.mxu0 0
          %487 = vmatpush1.bf16.msra.mxu0 0
          %488 = vmatprep.subr.bf16.mxu0 0
          %489 = vmatpush1.bf16.msra.mxu0 0
          %490 = vmatprep.subr.bf16.mxu0 0
          %491 = vmatpush1.bf16.msra.mxu0 0
          %492 = vmatprep.subr.bf16.mxu0 0
          %493 = vmatpush1.bf16.msra.mxu0 0
          %494 = vmatprep.subr.bf16.mxu0 0
          %495 = vmatpush1.bf16.msra.mxu0 0
          %496 = vmatprep.subr.bf16.mxu0 0
          %497 = vmatpush1.bf16.msra.mxu0 0
          %498 = vmatprep.subr.bf16.mxu0 0
          %499 = vmatpush1.bf16.msra.mxu0 0
          %500 = vmatprep.subr.bf16.mxu0 0
          %501 = vmatpush1.bf16.msra.mxu0 0
          %502 = vmatprep.mubr.bf16.mxu0 0
          %503 = vmatmul.mubr.bf16.gmra.mrb[0].mxu0 %v290
          %v504 = vpop.f32.mrb[0].mxu0
          %v505 = vadd.f32 0.0, %v504
          %v506 = vpop.f32.mrb[0].mxu0
          %v507 = vpop.f32.mrb[0].mxu0
          %v508 = vadd.f32 0.0, %v507
          %v509 = vpop.f32.mrb[0].mxu0
          %510 = vmatprep.mubr.bf16.mxu0 0
          %511 = vmatmul.mubr.bf16.gmra.mrb[0].mxu0 %v291
          %v512 = vpop.f32.mrb[0].mxu0
          %v513 = vadd.f32 0.0, %v512
          %v514 = vpop.f32.mrb[0].mxu0
          %v515 = vpop.f32.mrb[0].mxu0
          %v516 = vpop.f32.mrb[0].mxu0
          %517 = vdwg.mxu0
          %vm521 = vcmask 1046528
          %v522 = vrot.slane %v505, 1
          %v523 = vrot.slane %v508, 1
          %v524 = vsel %vm521, %v522, %v523
          %v525 = vrot.slane %v513, 1
          %v526 = vsel %vm521, %v523, %v525
          %v529 = vadd.f32 %v403, %v524
          %v530 = vadd.f32 %v404, %v526
          %s531 = scalar_lea.vmem [#allocation7], 128
          %v532 = vld [vmem:[%s531] sm:$0xf]
          %v533 = vld [vmem:[%s531 + $0x4] sm:$0xf]
          %v534 = vld [vmem:[%s531 + $0x8] sm:$0xf]
          %v535 = vld [vmem:[%s531 + $0xc] sm:$0xf]
          %v536 = vld [vmem:[%s531 + $0x10] sm:$0xf]
          %v537 = vld [vmem:[%s531 + $0x14] sm:$0xf]
          %v538 = vld [vmem:[%s531 + $0x18] sm:$0xf]
          %v539 = vld [vmem:[%s531 + $0x1c] sm:$0xf]
          %v540 = vld [vmem:[%s531 + $0x20] sm:$0xf]
          %v541 = vld [vmem:[%s531 + $0x24] sm:$0xf]
          %v542 = vld [vmem:[%s531 + $0x28] sm:$0xf]
          %v543 = vld [vmem:[%s531 + $0x2c] sm:$0xf]
          %v544 = vld [vmem:[%s531 + $0x30] sm:$0xf]
          %v545 = vld [vmem:[%s531 + $0x34] sm:$0xf]
          %v546 = vld [vmem:[%s531 + $0x38] sm:$0xf]
          %v547 = vld [vmem:[%s531 + $0x3c] sm:$0xf]
          %v564 = vunpack.c.l.b16 %v532
          %v565 = vunpack.c.l.b16 %v533
          %v566 = vunpack.c.l.b16 %v534
          %v567 = vunpack.c.l.b16 %v535
          %v568 = vunpack.c.l.b16 %v536
          %v569 = vunpack.c.l.b16 %v537
          %v570 = vunpack.c.l.b16 %v538
          %v571 = vunpack.c.l.b16 %v539
          %v572 = vunpack.c.l.b16 %v540
          %v573 = vunpack.c.l.b16 %v541
          %v574 = vunpack.c.l.b16 %v542
          %v575 = vunpack.c.l.b16 %v543
          %v576 = vunpack.c.l.b16 %v544
          %v577 = vunpack.c.l.b16 %v545
          %v578 = vunpack.c.l.b16 %v546
          %v579 = vunpack.c.l.b16 %v547
          %v580 = vpack.c.b16 %v565, %v564
          %v581 = vpack.c.b16 %v567, %v566
          %v582 = vpack.c.b16 %v569, %v568
          %v583 = vpack.c.b16 %v571, %v570
          %v584 = vpack.c.b16 %v573, %v572
          %v585 = vpack.c.b16 %v575, %v574
          %v586 = vpack.c.b16 %v577, %v576
          %v587 = vpack.c.b16 %v579, %v578
          %596 = vmatprep.subr.bf16.mxu0 0
          %597 = vmatpush1.bf16.msra.mxu0 %v580
          %598 = vmatprep.subr.bf16.mxu0 0
          %599 = vmatpush1.bf16.msra.mxu0 %v581
          %600 = vmatprep.subr.bf16.mxu0 0
          %601 = vmatpush1.bf16.msra.mxu0 %v582
          %602 = vmatprep.subr.bf16.mxu0 0
          %603 = vmatpush1.bf16.msra.mxu0 %v583
          %604 = vmatprep.subr.bf16.mxu0 0
          %605 = vmatpush1.bf16.msra.mxu0 %v584
          %606 = vmatprep.subr.bf16.mxu0 0
          %607 = vmatpush1.bf16.msra.mxu0 %v585
          %608 = vmatprep.subr.bf16.mxu0 0
          %609 = vmatpush1.bf16.msra.mxu0 %v586
          %610 = vmatprep.subr.bf16.mxu0 0
          %611 = vmatpush1.bf16.msra.mxu0 %v587
          %612 = vmatprep.subr.bf16.mxu0 0
          %613 = vmatpush1.bf16.msra.mxu0 0
          %614 = vmatprep.subr.bf16.mxu0 0
          %615 = vmatpush1.bf16.msra.mxu0 0
          %616 = vmatprep.subr.bf16.mxu0 0
          %617 = vmatpush1.bf16.msra.mxu0 0
          %618 = vmatprep.subr.bf16.mxu0 0
          %619 = vmatpush1.bf16.msra.mxu0 0
          %620 = vmatprep.subr.bf16.mxu0 0
          %621 = vmatpush1.bf16.msra.mxu0 0
          %622 = vmatprep.subr.bf16.mxu0 0
          %623 = vmatpush1.bf16.msra.mxu0 0
          %624 = vmatprep.subr.bf16.mxu0 0
          %625 = vmatpush1.bf16.msra.mxu0 0
          %626 = vmatprep.subr.bf16.mxu0 0
          %627 = vmatpush1.bf16.msra.mxu0 0
          %628 = vmatprep.mubr.bf16.mxu0 0
          %629 = vmatmul.mubr.bf16.gmra.mrb[0].mxu0 %v290
          %v630 = vpop.f32.mrb[0].mxu0
          %v631 = vadd.f32 0.0, %v630
          %v632 = vpop.f32.mrb[0].mxu0
          %v633 = vpop.f32.mrb[0].mxu0
          %v634 = vadd.f32 0.0, %v633
          %v635 = vpop.f32.mrb[0].mxu0
          %636 = vmatprep.mubr.bf16.mxu0 0
          %637 = vmatmul.mubr.bf16.gmra.mrb[0].mxu0 %v291
          %v638 = vpop.f32.mrb[0].mxu0
          %v639 = vadd.f32 0.0, %v638
          %v640 = vpop.f32.mrb[0].mxu0
          %v641 = vpop.f32.mrb[0].mxu0
          %v642 = vpop.f32.mrb[0].mxu0
          %643 = vdwg.mxu0
          %vm647 = vcmask 1045504
          %v648 = vrot.slane %v631, 2
          %v649 = vrot.slane %v634, 2
          %v650 = vsel %vm647, %v648, %v649
          %v651 = vrot.slane %v639, 2
          %v652 = vsel %vm647, %v649, %v651
          %v655 = vadd.f32 %v529, %v650
          %v656 = vadd.f32 %v530, %v652
          %s657 = scalar_lea.vmem [#allocation7], 192
          %v658 = vld [vmem:[%s657] sm:$0xf]
          %v659 = vld [vmem:[%s657 + $0x4] sm:$0xf]
          %v660 = vld [vmem:[%s657 + $0x8] sm:$0xf]
          %v661 = vld [vmem:[%s657 + $0xc] sm:$0xf]
          %v662 = vld [vmem:[%s657 + $0x10] sm:$0xf]
          %v663 = vld [vmem:[%s657 + $0x14] sm:$0xf]
          %v664 = vld [vmem:[%s657 + $0x18] sm:$0xf]
          %v665 = vld [vmem:[%s657 + $0x1c] sm:$0xf]
          %v666 = vld [vmem:[%s657 + $0x20] sm:$0xf]
          %v667 = vld [vmem:[%s657 + $0x24] sm:$0xf]
          %v668 = vld [vmem:[%s657 + $0x28] sm:$0xf]
          %v669 = vld [vmem:[%s657 + $0x2c] sm:$0xf]
          %v670 = vld [vmem:[%s657 + $0x30] sm:$0xf]
          %v671 = vld [vmem:[%s657 + $0x34] sm:$0xf]
          %v672 = vld [vmem:[%s657 + $0x38] sm:$0xf]
          %v673 = vld [vmem:[%s657 + $0x3c] sm:$0xf]
          %v690 = vunpack.c.l.b16 %v658
          %v691 = vunpack.c.l.b16 %v659
          %v692 = vunpack.c.l.b16 %v660
          %v693 = vunpack.c.l.b16 %v661
          %v694 = vunpack.c.l.b16 %v662
          %v695 = vunpack.c.l.b16 %v663
          %v696 = vunpack.c.l.b16 %v664
          %v697 = vunpack.c.l.b16 %v665
          %v698 = vunpack.c.l.b16 %v666
          %v699 = vunpack.c.l.b16 %v667
          %v700 = vunpack.c.l.b16 %v668
          %v701 = vunpack.c.l.b16 %v669
          %v702 = vunpack.c.l.b16 %v670
          %v703 = vunpack.c.l.b16 %v671
          %v704 = vunpack.c.l.b16 %v672
          %v705 = vunpack.c.l.b16 %v673
          %v706 = vpack.c.b16 %v691, %v690
          %v707 = vpack.c.b16 %v693, %v692
          %v708 = vpack.c.b16 %v695, %v694
          %v709 = vpack.c.b16 %v697, %v696
          %v710 = vpack.c.b16 %v699, %v698
          %v711 = vpack.c.b16 %v701, %v700
          %v712 = vpack.c.b16 %v703, %v702
          %v713 = vpack.c.b16 %v705, %v704
          %722 = vmatprep.subr.bf16.mxu0 0
          %723 = vmatpush1.bf16.msra.mxu0 %v706
          %724 = vmatprep.subr.bf16.mxu0 0
          %725 = vmatpush1.bf16.msra.mxu0 %v707
          %726 = vmatprep.subr.bf16.mxu0 0
          %727 = vmatpush1.bf16.msra.mxu0 %v708
          %728 = vmatprep.subr.bf16.mxu0 0
          %729 = vmatpush1.bf16.msra.mxu0 %v709
          %730 = vmatprep.subr.bf16.mxu0 0
          %731 = vmatpush1.bf16.msra.mxu0 %v710
          %732 = vmatprep.subr.bf16.mxu0 0
          %733 = vmatpush1.bf16.msra.mxu0 %v711
          %734 = vmatprep.subr.bf16.mxu0 0
          %735 = vmatpush1.bf16.msra.mxu0 %v712
          %736 = vmatprep.subr.bf16.mxu0 0
          %737 = vmatpush1.bf16.msra.mxu0 %v713
          %738 = vmatprep.subr.bf16.mxu0 0
          %739 = vmatpush1.bf16.msra.mxu0 0
          %740 = vmatprep.subr.bf16.mxu0 0
          %741 = vmatpush1.bf16.msra.mxu0 0
          %742 = vmatprep.subr.bf16.mxu0 0
          %743 = vmatpush1.bf16.msra.mxu0 0
          %744 = vmatprep.subr.bf16.mxu0 0
          %745 = vmatpush1.bf16.msra.mxu0 0
          %746 = vmatprep.subr.bf16.mxu0 0
          %747 = vmatpush1.bf16.msra.mxu0 0
          %748 = vmatprep.subr.bf16.mxu0 0
          %749 = vmatpush1.bf16.msra.mxu0 0
          %750 = vmatprep.subr.bf16.mxu0 0
          %751 = vmatpush1.bf16.msra.mxu0 0
          %752 = vmatprep.subr.bf16.mxu0 0
          %753 = vmatpush1.bf16.msra.mxu0 0
          %754 = vmatprep.mubr.bf16.mxu0 0
          %755 = vmatmul.mubr.bf16.gmra.mrb[0].mxu0 %v290
          %v756 = vpop.f32.mrb[0].mxu0
          %v757 = vadd.f32 0.0, %v756
          %v758 = vpop.f32.mrb[0].mxu0
          %v759 = vpop.f32.mrb[0].mxu0
          %v760 = vadd.f32 0.0, %v759
          %v761 = vpop.f32.mrb[0].mxu0
          %762 = vmatprep.mubr.bf16.mxu0 0
          %763 = vmatmul.mubr.bf16.gmra.mrb[0].mxu0 %v291
          %v764 = vpop.f32.mrb[0].mxu0
          %v765 = vadd.f32 0.0, %v764
          %v766 = vpop.f32.mrb[0].mxu0
          %v767 = vpop.f32.mrb[0].mxu0
          %v768 = vpop.f32.mrb[0].mxu0
          %769 = vdwg.mxu0
          %vm773 = vcmask 1044480
          %v774 = vrot.slane %v757, 3
          %v775 = vrot.slane %v760, 3
          %v776 = vsel %vm773, %v774, %v775
          %v777 = vrot.slane %v765, 3
          %v778 = vsel %vm773, %v775, %v777
          %v781 = vadd.f32 %v655, %v776
          %v782 = vadd.f32 %v656, %v778
          %s783 = scalar_lea.vmem [#allocation7], 256
          %v784 = vld [vmem:[%s783] sm:$0xf]
          %v785 = vld [vmem:[%s783 + $0x4] sm:$0xf]
          %v786 = vld [vmem:[%s783 + $0x8] sm:$0xf]
          %v787 = vld [vmem:[%s783 + $0xc] sm:$0xf]
          %v788 = vld [vmem:[%s783 + $0x10] sm:$0xf]
          %v789 = vld [vmem:[%s783 + $0x14] sm:$0xf]
          %v790 = vld [vmem:[%s783 + $0x18] sm:$0xf]
          %v791 = vld [vmem:[%s783 + $0x1c] sm:$0xf]
          %v792 = vld [vmem:[%s783 + $0x20] sm:$0xf]
          %v793 = vld [vmem:[%s783 + $0x24] sm:$0xf]
          %v794 = vld [vmem:[%s783 + $0x28] sm:$0xf]
          %v795 = vld [vmem:[%s783 + $0x2c] sm:$0xf]
          %v796 = vld [vmem:[%s783 + $0x30] sm:$0xf]
          %v797 = vld [vmem:[%s783 + $0x34] sm:$0xf]
          %v798 = vld [vmem:[%s783 + $0x38] sm:$0xf]
          %v799 = vld [vmem:[%s783 + $0x3c] sm:$0xf]
          %v816 = vunpack.c.l.b16 %v784
          %v817 = vunpack.c.l.b16 %v785
          %v818 = vunpack.c.l.b16 %v786
          %v819 = vunpack.c.l.b16 %v787
          %v820 = vunpack.c.l.b16 %v788
          %v821 = vunpack.c.l.b16 %v789
          %v822 = vunpack.c.l.b16 %v790
          %v823 = vunpack.c.l.b16 %v791
          %v824 = vunpack.c.l.b16 %v792
          %v825 = vunpack.c.l.b16 %v793
          %v826 = vunpack.c.l.b16 %v794
          %v827 = vunpack.c.l.b16 %v795
          %v828 = vunpack.c.l.b16 %v796
          %v829 = vunpack.c.l.b16 %v797
          %v830 = vunpack.c.l.b16 %v798
          %v831 = vunpack.c.l.b16 %v799
          %v832 = vpack.c.b16 %v817, %v816
          %v833 = vpack.c.b16 %v819, %v818
          %v834 = vpack.c.b16 %v821, %v820
          %v835 = vpack.c.b16 %v823, %v822
          %v836 = vpack.c.b16 %v825, %v824
          %v837 = vpack.c.b16 %v827, %v826
          %v838 = vpack.c.b16 %v829, %v828
          %v839 = vpack.c.b16 %v831, %v830
          %848 = vmatprep.subr.bf16.mxu0 0
          %849 = vmatpush1.bf16.msra.mxu0 %v832
          %850 = vmatprep.subr.bf16.mxu0 0
          %851 = vmatpush1.bf16.msra.mxu0 %v833
          %852 = vmatprep.subr.bf16.mxu0 0
          %853 = vmatpush1.bf16.msra.mxu0 %v834
          %854 = vmatprep.subr.bf16.mxu0 0
          %855 = vmatpush1.bf16.msra.mxu0 %v835
          %856 = vmatprep.subr.bf16.mxu0 0
          %857 = vmatpush1.bf16.msra.mxu0 %v836
          %858 = vmatprep.subr.bf16.mxu0 0
          %859 = vmatpush1.bf16.msra.mxu0 %v837
          %860 = vmatprep.subr.bf16.mxu0 0
          %861 = vmatpush1.bf16.msra.mxu0 %v838
          %862 = vmatprep.subr.bf16.mxu0 0
          %863 = vmatpush1.bf16.msra.mxu0 %v839
          %864 = vmatprep.subr.bf16.mxu0 0
          %865 = vmatpush1.bf16.msra.mxu0 0
          %866 = vmatprep.subr.bf16.mxu0 0
          %867 = vmatpush1.bf16.msra.mxu0 0
          %868 = vmatprep.subr.bf16.mxu0 0
          %869 = vmatpush1.bf16.msra.mxu0 0
          %870 = vmatprep.subr.bf16.mxu0 0
          %871 = vmatpush1.bf16.msra.mxu0 0
          %872 = vmatprep.subr.bf16.mxu0 0
          %873 = vmatpush1.bf16.msra.mxu0 0
          %874 = vmatprep.subr.bf16.mxu0 0
          %875 = vmatpush1.bf16.msra.mxu0 0
          %876 = vmatprep.subr.bf16.mxu0 0
          %877 = vmatpush1.bf16.msra.mxu0 0
          %878 = vmatprep.subr.bf16.mxu0 0
          %879 = vmatpush1.bf16.msra.mxu0 0
          %880 = vmatprep.mubr.bf16.mxu0 0
          %881 = vmatmul.mubr.bf16.gmra.mrb[0].mxu0 %v290
          %v882 = vpop.f32.mrb[0].mxu0
          %v883 = vadd.f32 0.0, %v882
          %v884 = vpop.f32.mrb[0].mxu0
          %v885 = vpop.f32.mrb[0].mxu0
          %v886 = vadd.f32 0.0, %v885
          %v887 = vpop.f32.mrb[0].mxu0
          %888 = vmatprep.mubr.bf16.mxu0 0
          %889 = vmatmul.mubr.bf16.gmra.mrb[0].mxu0 %v291
          %v890 = vpop.f32.mrb[0].mxu0
          %v891 = vadd.f32 0.0, %v890
          %v892 = vpop.f32.mrb[0].mxu0
          %v893 = vpop.f32.mrb[0].mxu0
          %v894 = vpop.f32.mrb[0].mxu0
          %895 = vdwg.mxu0
          %vm899 = vcmask 1043456
          %v900 = vrot.slane %v883, 4
          %v901 = vrot.slane %v886, 4
          %v902 = vsel %vm899, %v900, %v901
          %v903 = vrot.slane %v891, 4
          %v904 = vsel %vm899, %v901, %v903
          %v907 = vadd.f32 %v781, %v902
          %v908 = vadd.f32 %v782, %v904
          %v909 = vld [vmem:[%s3] sm:$0x1]
          %v911 = vlaneseq
          %v912 = vshrl.u32 %v911, 7
          %v913 = vsub.s32 0, %v912
          %v914 = vrot.slane %v909, %v913
          %v916 = vmul.f32 %v907, %v914
          %v917 = vmul.f32 %v908, %v914
          %v918 = vld [vmem:[%s4] sm:$0x1]
          %v920 = vlaneseq
          %v921 = vshrl.u32 %v920, 7
          %v922 = vsub.s32 0, %v921
          %v923 = vrot.slane %v918, %v922
          %v925 = vadd.f32 %v916, %v923
          %v926 = vadd.f32 %v917, %v923
          %v927 = vtanh.pop %v925
          %v928 = vtanh.pop %v926
          %v929 = vpack.c.bf16 %v928, %v927
          %v931 = vunpack.c.l.b16 %v929
          %v932 = vunpack.c.h.b16 %v929
          %v933 = vpack.c.b16 %v931, %v931
          %v934 = vpack.c.b16 %v932, %v932
          %937 = vst [vmem:[%s249] sm:$0xf] %v933
          %938 = vst [vmem:[%s249 + $0x4] sm:$0xf] %v934
        $region48: #{tpu_custom_call.1} parent=35 // pred_fallthru
          _
        %p939 = scmp.ge.s32.totalorder %s253, %s254
        // Predicated region
        $region49: #{tpu_custom_call.1} parent=35 // pred_check
          %p940 = pneg %p939
        $region50: #{tpu_custom_call.1} parent=35 // pred_check_branch
          %942 = sbr.rel (%p940) target = $region52
        $region51: #{tpu_custom_call.1} parent=35 // pred_region
          %v943 = vld [vmem:[%s4] sm:$0x1]
          %v945 = vlaneseq
          %v946 = vshrl.u32 %v945, 7
          %v947 = vsub.s32 0, %v946
          %v948 = vrot.slane %v943, %v947
          %v950 = vtanh.pop %v948
          %v951 = vpack.c.bf16 %v950, %v950
          %v953 = vunpack.c.l.b16 %v951
          %v954 = vpack.c.b16 %v953, %v953
          %956 = vst [vmem:[%s249] sm:$0xf] %v954
          %957 = vst [vmem:[%s249 + $0x4] sm:$0xf] %v954
        $region52: #{tpu_custom_call.1} parent=35 // pred_fallthru
          _
        %s958 = sand.u32 %s138, 1
        %s959 = scalar_lea.sflag [#allocation6], %s958
        %s960 = sand.u32 %s138, 1
        %s961 = smul.addr %s960, 8
        %s962 = scalar_lea.vmem [#allocation9], %s961
        // Predicated region
        $region53: #{tpu_custom_call.1} parent=35 // pred_check
          %p963 = pneg %p148
        $region54: #{tpu_custom_call.1} parent=35 // pred_check_branch
          %965 = sbr.rel (%p963) target = $region56
        $region55: #{tpu_custom_call.1} parent=35 // pred_region
          %s966 = smul.u32 2, %s32
          %s968 = ssub.s32 128, 128
          %969 = vsyncadd %s959, %s968
          %s970 = smul.addr %s31, 4
          %s971 = sadd.s32 %s966, %s970
          %s972 = smul.addr %s971, 64
          %s973 = scalar_lea.hbm %s5, %s972
          %s974 = sshll.u32 %s962, 4
          %s975 = int_to_ptr.vmem [resolvable:$true] %s974
          %980 = dma.vmem_to_hbm [thread:$0]  %s975, 128, %s973, %s959, 64, 64, 4
        $region56: #{tpu_custom_call.1} parent=35 // pred_fallthru
          _
      $region36: #{tpu_custom_call.1} parent=5 // pred_fallthru
        _
      %p981 = scmp.le.s32.totalorder 2, %s22
      // Predicated region
      $region57: #{tpu_custom_call.1} parent=5 // pred_check
        %p982 = pneg %p981
      $region58: #{tpu_custom_call.1} parent=5 // pred_check_branch
        %984 = sbr.rel (%p982) target = $region60
      $region59: #{tpu_custom_call.1} parent=5 // pred_region
        %s985 = ssub.s32 %s22, 2
        // Predicated region
        $region61: #{tpu_custom_call.1} parent=59 // pred_check
          %p986 = pneg %p154
        $region62: #{tpu_custom_call.1} parent=59 // pred_check_branch
          %988 = sbr.rel (%p986) target = $region64
        $region63: #{tpu_custom_call.1} parent=59 // pred_region
          %s989 = sand.u32 %s139, 1
          %s990 = scalar_lea.sflag [#allocation6], %s989
          %s991 = sand.u32 %s139, 1
          %s992 = smul.addr %s991, 8
          %s993 = scalar_lea.vmem [#allocation9], %s992
          %994 = dma.done %s990, 128
        $region64: #{tpu_custom_call.1} parent=59 // pred_fallthru
          _
      $region60: #{tpu_custom_call.1} parent=5 // pred_fallthru
        _
    $region6: #{tpu_custom_call.1} parent=1 // loop_footer
      %s26 = sadd.s32 1, %s22
    $region7: #{tpu_custom_call.1} parent=1 // loop_footer_branch
      %21 = sbr.rel target = $region3
    $region8: #{tpu_custom_call.1} parent=1 // loop_exit
      _
    %995 = vsyncpa [#allocation5], 1
    %s996 = scalar_lea.sflag [#allocation5], 1
    %997 = vsyncpa %s996, 1
    %998 = vsyncpa [#allocation8], 1
    %999 = vsyncpa [#allocation6], 1
    %s1000 = scalar_lea.sflag [#allocation6], 1
    %1001 = vsyncpa %s1000, 1

</llo_original>
